<compile_context>
chip_gen: v7x
topology: tpu7x:2x2x1
jax: 0.10.0
libtpu: 0.0.40
codegen_flags: <defaults>
</compile_context>

<pallas_src>
import functools

import jax
import jax.numpy as jnp
from jax.experimental import pallas as pl
from jax.experimental.pallas import tpu as pltpu


def _round_up(n, m):
    return ((n + m - 1) // m) * m


# -----------------------------------------------------------------------------
# Pallas kernel: fused MLP over one block of target rows.
#   refs = (zb[1,F], x[TN,x_dim], w0x[8,F], w1[F,F], ..., w_{L-1}[F,F],
#           b_rest[8,F] (iff L>1), out[TN,out_dim])
# -----------------------------------------------------------------------------
def _cnp_decoder_kernel(n_layers, x_dim, out_dim, zb_ref, x_ref, w0x_ref, *refs):
    out_ref = refs[-1]
    if n_layers > 1:
        w_refs = refs[:n_layers - 1]
        b_ref = refs[n_layers - 1]
    else:
        w_refs, b_ref = (), None

    # Layer 0 with the concat/repeat folded away:
    #   concat([z, x]) @ W0 + b0 == (z @ W0_z + b0) + x @ W0_x
    # The z term is the precomputed [1, F] fused-bias row (identical for every row);
    # the x term is x_dim rank-1 broadcast-FMAs on the VPU (x_dim is tiny).
    x = x_ref[...].astype(jnp.float32)                      # [TN, x_dim]
    h = x[:, 0:1] * w0x_ref[0:1, :]                         # [TN, F] rank-1 update
    for j in range(1, x_dim):
        h = h + x[:, j:j + 1] * w0x_ref[j:j + 1, :]
    h = h + zb_ref[...]                                     # broadcast fused z-bias
    if n_layers > 1:
        h = jnp.maximum(h, 0.0)

    # Remaining Linear(+ReLU) layers on the MXU (f32 accumulation).
    for i in range(n_layers - 1):
        h = jnp.dot(h, w_refs[i][...], preferred_element_type=jnp.float32)
        h = h + b_ref[i:i + 1, :]
        if i < n_layers - 2:                                # last Linear has no ReLU
            h = jnp.maximum(h, 0.0)

    out_ref[...] = h[:, :out_dim].astype(out_ref.dtype)     # narrow store


# -----------------------------------------------------------------------------
# One-time parameter preparation (hoisted out of the per-call path; cache this).
# -----------------------------------------------------------------------------
def prepare_decoder_params(weights, biases, *, x_dim, embedded_dim):
    """weights[i]: [d_i, d_{i+1}], biases[i]: [d_{i+1}]; d_0 == embedded_dim + x_dim."""
    n_layers = len(weights)
    dims = [weights[0].shape[0]] + [w.shape[1] for w in weights]
    assert dims[0] == embedded_dim + x_dim
    feat_pad = _round_up(max(dims[1:]), 128)                # hidden/output lanes only

    w0 = jnp.asarray(weights[0], jnp.float32)
    d1 = dims[1]

    # z-half of layer 0 (+ b0): used only for the per-call host-side fused-bias row.
    w0_z = (jnp.zeros((embedded_dim, feat_pad), jnp.float32)
            .at[:, :d1].set(w0[:embedded_dim]))
    b0 = (jnp.zeros((1, feat_pad), jnp.float32)
          .at[0, :d1].set(jnp.asarray(biases[0], jnp.float32)))

    # x-half of layer 0: small resident slab driven via rank-1 VPU FMAs in-kernel.
    x_sub = max(8, _round_up(x_dim, 8))
    w0_x = (jnp.zeros((x_sub, feat_pad), jnp.float32)
            .at[:x_dim, :d1].set(w0[embedded_dim:]))

    # Layers 1..L-1: padded resident weights + biases packed into one array.
    w_rest = []
    b_sub = max(8, _round_up(max(n_layers - 1, 1), 8))
    b_rest = jnp.zeros((b_sub, feat_pad), jnp.float32)
    for i in range(1, n_layers):
        d_in, d_out = weights[i].shape
        w_rest.append(jnp.zeros((feat_pad, feat_pad), jnp.float32)
                      .at[:d_in, :d_out].set(jnp.asarray(weights[i], jnp.float32)))
        b_rest = b_rest.at[i - 1, :d_out].set(jnp.asarray(biases[i], jnp.float32))

    return {
        "w0_z": w0_z, "b0": b0, "w0_x": w0_x,
        "w_rest": tuple(w_rest), "b_rest": b_rest,
        "n_layers": n_layers,
        "feat_pad": feat_pad,
        "embedded_dim": embedded_dim,
        "x_dim": x_dim,
        "out_dim": dims[-1],
    }


# -----------------------------------------------------------------------------
# Per-call forward: fused z-bias, narrow x pad (rows only), pallas_call, slice.
# -----------------------------------------------------------------------------
def cnp_decoder_forward(z_c, x_t, prepared, *, noise=0.1, max_rows_per_block=1024):
    F = prepared["feat_pad"]
    emb = prepared["embedded_dim"]
    x_dim = prepared["x_dim"]
    n_layers = prepared["n_layers"]
    out_dim = prepared["out_dim"]

    assert z_c.shape == (emb,)
    assert x_t.ndim == 2 and x_t.shape[1] == x_dim
    n_t = x_t.shape[0]
    assert n_t >= 1

    # Row tile: small N -> one block; large N -> 1024-row blocks (per-step overhead
    # ~0.35 us; per-row VMEM is ~12 B in + 4 B out, far under any VMEM budget).
    tn = max_rows_per_block if n_t >= max_rows_per_block else max(8, _round_up(n_t, 8))
    n_pad = _round_up(n_t, tn)
    grid = (n_pad // tn,)

    # Fused z-bias row: (z_c @ W0_z + b0), identical for every target row.
    zb = z_c[None, :].astype(jnp.float32) @ prepared["w0_z"] + prepared["b0"]   # [1, F]

    # x stays narrow; only row-pad to the block multiple (cheap: x_dim lanes wide).
    x_p = x_t.astype(jnp.float32)
    if n_pad != n_t:
        x_p = jnp.zeros((n_pad, x_dim), jnp.float32).at[:n_t].set(x_p)

    operands = [zb, x_p, prepared["w0_x"]]
    in_specs = [
        pl.BlockSpec((1, F), lambda i: (0, 0)),                              # fused z-bias
        pl.BlockSpec((tn, x_dim), lambda i: (i, 0)),                         # x row block
        pl.BlockSpec((prepared["w0_x"].shape[0], F), lambda i: (0, 0)),      # W0_x (resident)
    ]
    for w in prepared["w_rest"]:                                             # weights (resident)
        operands.append(w)
        in_specs.append(pl.BlockSpec((F, F), lambda i: (0, 0)))
    if n_layers > 1:                                                         # packed biases
        operands.append(prepared["b_rest"])
        in_specs.append(pl.BlockSpec((prepared["b_rest"].shape[0], F), lambda i: (0, 0)))

    kernel = functools.partial(_cnp_decoder_kernel, n_layers, x_dim, out_dim)
    mean_p = pl.pallas_call(
        kernel,
        out_shape=jax.ShapeDtypeStruct((n_pad, out_dim), jnp.float32),
        grid=grid,
        in_specs=in_specs,
        out_specs=pl.BlockSpec((tn, out_dim), lambda i: (i, 0)),
        compiler_params=pltpu.CompilerParams(
            dimension_semantics=("parallel",),
            vmem_limit_bytes=32 * 1024 * 1024,
        ),
    )(*operands)

    mean = mean_p[:n_t] if n_pad != n_t else mean_p
    # TODO(synk): torch.distributions.Normal has no Pallas equivalent; the
    # NormalLikelihood(noise=0.1) is represented by returning (mean, sigma).
    sigma = jnp.full_like(mean, noise)
    return mean, sigma


# -----------------------------------------------------------------------------
# Pure-JAX reference (mirrors the PyTorch module exactly, f32 throughout).
# -----------------------------------------------------------------------------
def cnp_decoder_reference(z_c, x_t, weights, biases):
    z = jnp.broadcast_to(z_c[None, :], (x_t.shape[0], z_c.shape[0]))
    h = jnp.concatenate([z, x_t], axis=-1).astype(jnp.float32)
    for i, (w, b) in enumerate(zip(weights, biases)):
        h = h @ w + b
        if i < len(weights) - 1:
            h = jnp.maximum(h, 0.0)
    return h  # Normal mean; sigma is the fixed likelihood noise


if __name__ == "__main__":
    # Small hyperparameters consistent with CNPDecoder.__init__.
    x_dim, y_dim = 2, 1
    hidden_dims = [32, 32]
    embedded_dim = 32
    out_mult = 1                   # NormalLikelihood(noise=0.1): homoscedastic -> multiplier 1

    dims = [embedded_dim + x_dim] + hidden_dims + [out_mult * y_dim]

    key = jax.random.PRNGKey(0)
    keys = jax.random.split(key, 3 + 2 * (len(dims) - 1))

    z_c = jax.random.normal(keys[0], (embedded_dim,), jnp.float32)
    x_t_small = jax.random.normal(keys[1], (16, x_dim), jnp.float32)    # single-block case
    x_t_big = jax.random.normal(keys[2], (300, x_dim), jnp.float32)     # ragged multi-block case

    weights, biases = [], []
    for i in range(len(dims) - 1):
        kw, kb = keys[3 + 2 * i], keys[4 + 2 * i]
        scale = 1.0 / jnp.sqrt(jnp.float32(dims[i]))
        weights.append(jax.random.uniform(kw, (dims[i], dims[i + 1]), jnp.float32, -scale, scale))
        biases.append(jax.random.uniform(kb, (dims[i + 1],), jnp.float32, -scale, scale))

    prepared = prepare_decoder_params(weights, biases, x_dim=x_dim, embedded_dim=embedded_dim)

    # Case 1: small N_t, one row block.
    ref_small = cnp_decoder_reference(z_c, x_t_small, weights, biases)
    mean_small, sigma_small = cnp_decoder_forward(z_c, x_t_small, prepared)
    mean_small = jax.block_until_ready(mean_small)
    assert mean_small.shape == (16, out_mult * y_dim)
    assert jnp.allclose(mean_small, ref_small, atol=1e-4, rtol=1e-4), (mean_small, ref_small)
    assert jnp.allclose(sigma_small, 0.1)

    # Case 2: multi-block grid with padded tail rows (exercises the row pipeline).
    ref_big = cnp_decoder_reference(z_c, x_t_big, weights, biases)
    mean_big, _ = cnp_decoder_forward(z_c, x_t_big, prepared, max_rows_per_block=128)
    mean_big = jax.block_until_ready(mean_big)
    assert mean_big.shape == (300, out_mult * y_dim)
    assert jnp.allclose(mean_big, ref_big, atol=1e-4, rtol=1e-4), (mean_big, ref_big)

    print("KERNEL_OK")
</pallas_src>

<mosaic_0001>
module attributes {stable_mosaic.version = 11 : i64} {
  func.func @_cnp_decoder_kernel(%arg0: i32, %arg1: memref<1x128xf32, #tpu.memory_space<vmem>>, %arg2: memref<16x2xf32, #tpu.memory_space<vmem>>, %arg3: memref<8x128xf32, #tpu.memory_space<vmem>>, %arg4: memref<128x128xf32, #tpu.memory_space<vmem>>, %arg5: memref<128x128xf32, #tpu.memory_space<vmem>>, %arg6: memref<8x128xf32, #tpu.memory_space<vmem>>, %arg7: memref<16x1xf32, #tpu.memory_space<vmem>>) attributes {dimension_semantics = [#tpu.dimension_semantics<parallel>], iteration_bounds = array<i64: 1>, scalar_prefetch = 0 : i64, scratch_operands = 0 : i64, tpu.core_type = #tpu.core_type<tc>, window_params = [{pipeline_mode = #tpu.pipeline_mode<synchronous>, transform_indices = @transform_0, window_bounds = array<i64: 1, 128>}, {transform_indices = @transform_1, window_bounds = array<i64: 16, 2>}, {pipeline_mode = #tpu.pipeline_mode<synchronous>, transform_indices = @transform_2, window_bounds = array<i64: 8, 128>}, {pipeline_mode = #tpu.pipeline_mode<synchronous>, transform_indices = @transform_3, window_bounds = array<i64: 128, 128>}, {pipeline_mode = #tpu.pipeline_mode<synchronous>, transform_indices = @transform_4, window_bounds = array<i64: 128, 128>}, {pipeline_mode = #tpu.pipeline_mode<synchronous>, transform_indices = @transform_5, window_bounds = array<i64: 8, 128>}, {transform_indices = @transform_6, window_bounds = array<i64: 16, 1>}]} {
    %c0 = arith.constant 0 : index
    %c0_0 = arith.constant 0 : index
    %0 = vector.load %arg2[%c0, %c0_0] : memref<16x2xf32, #tpu.memory_space<vmem>>, vector<16x2xf32>
    %1 = vector.extract_strided_slice %0 {offsets = [0, 0], sizes = [16, 1], strides = [1, 1]} : vector<16x2xf32> to vector<16x1xf32>
    %c0_1 = arith.constant 0 : index
    %c0_2 = arith.constant 0 : index
    %2 = vector.load %arg3[%c0_1, %c0_2] : memref<8x128xf32, #tpu.memory_space<vmem>>, vector<1x128xf32>
    %3 = vector.broadcast %1 : vector<16x1xf32> to vector<16x128xf32>
    %4 = vector.broadcast %2 : vector<1x128xf32> to vector<16x128xf32>
    %5 = arith.mulf %3, %4 : vector<16x128xf32>
    %6 = vector.extract_strided_slice %0 {offsets = [0, 1], sizes = [16, 1], strides = [1, 1]} : vector<16x2xf32> to vector<16x1xf32>
    %c1 = arith.constant 1 : index
    %c0_3 = arith.constant 0 : index
    %7 = vector.load %arg3[%c1, %c0_3] : memref<8x128xf32, #tpu.memory_space<vmem>>, vector<1x128xf32>
    %8 = vector.broadcast %6 : vector<16x1xf32> to vector<16x128xf32>
    %9 = vector.broadcast %7 : vector<1x128xf32> to vector<16x128xf32>
    %10 = arith.mulf %8, %9 : vector<16x128xf32>
    %11 = arith.addf %5, %10 : vector<16x128xf32>
    %c0_4 = arith.constant 0 : index
    %c0_5 = arith.constant 0 : index
    %12 = vector.load %arg1[%c0_4, %c0_5] : memref<1x128xf32, #tpu.memory_space<vmem>>, vector<1x128xf32>
    %13 = vector.broadcast %12 : vector<1x128xf32> to vector<16x128xf32>
    %14 = arith.addf %11, %13 : vector<16x128xf32>
    %cst = arith.constant 0.000000e+00 : f32
    %15 = vector.broadcast %cst : f32 to vector<16x128xf32>
    %16 = arith.maximumf %14, %15 : vector<16x128xf32>
    %c0_6 = arith.constant 0 : index
    %c0_7 = arith.constant 0 : index
    %17 = vector.load %arg4[%c0_6, %c0_7] : memref<128x128xf32, #tpu.memory_space<vmem>>, vector<128x128xf32>
    %cst_8 = arith.constant dense<0.000000e+00> : vector<16x128xf32>
    %18 = tpu.matmul %16, %17, %cst_8 {dimension_numbers = #tpu.dot_dimension_numbers<[1], [0], [0], [1], [0, 0, 1, 1], [], []>} : vector<16x128xf32>, vector<128x128xf32>, vector<16x128xf32> -> vector<16x128xf32>
    %c0_9 = arith.constant 0 : index
    %c0_10 = arith.constant 0 : index
    %19 = vector.load %arg6[%c0_9, %c0_10] : memref<8x128xf32, #tpu.memory_space<vmem>>, vector<1x128xf32>
    %20 = vector.broadcast %19 : vector<1x128xf32> to vector<16x128xf32>
    %21 = arith.addf %18, %20 : vector<16x128xf32>
    %cst_11 = arith.constant 0.000000e+00 : f32
    %22 = vector.broadcast %cst_11 : f32 to vector<16x128xf32>
    %23 = arith.maximumf %21, %22 : vector<16x128xf32>
    %c0_12 = arith.constant 0 : index
    %c0_13 = arith.constant 0 : index
    %24 = vector.load %arg5[%c0_12, %c0_13] : memref<128x128xf32, #tpu.memory_space<vmem>>, vector<128x128xf32>
    %cst_14 = arith.constant dense<0.000000e+00> : vector<16x128xf32>
    %25 = tpu.matmul %23, %24, %cst_14 {dimension_numbers = #tpu.dot_dimension_numbers<[1], [0], [0], [1], [0, 0, 1, 1], [], []>} : vector<16x128xf32>, vector<128x128xf32>, vector<16x128xf32> -> vector<16x128xf32>
    %c1_15 = arith.constant 1 : index
    %c0_16 = arith.constant 0 : index
    %26 = vector.load %arg6[%c1_15, %c0_16] : memref<8x128xf32, #tpu.memory_space<vmem>>, vector<1x128xf32>
    %27 = vector.broadcast %26 : vector<1x128xf32> to vector<16x128xf32>
    %28 = arith.addf %25, %27 : vector<16x128xf32>
    %29 = vector.extract_strided_slice %28 {offsets = [0, 0], sizes = [16, 1], strides = [1, 1]} : vector<16x128xf32> to vector<16x1xf32>
    %c0_17 = arith.constant 0 : index
    %c0_18 = arith.constant 0 : index
    %30 = vector.load %arg7[%c0_17, %c0_18] : memref<16x1xf32, #tpu.memory_space<vmem>>, vector<16x1xf32>
    tpu.vector_store %arg7[%c0_17, %c0_18], %29 {strides = array<i32>} : memref<16x1xf32, #tpu.memory_space<vmem>>, vector<16x1xf32>,
    return
  }
  func.func @transform_0(%arg0: i32) -> (i32, i32) {
    %c0_i32 = arith.constant 0 : i32
    %c0_i32_0 = arith.constant 0 : i32
    %c0_i32_1 = arith.constant 0 : i32
    return %c0_i32, %c0_i32_0 : i32, i32
  }
  func.func @transform_1(%arg0: i32) -> (i32, i32) {
    %c0_i32 = arith.constant 0 : i32
    %c0_i32_0 = arith.constant 0 : i32
    return %arg0, %c0_i32 : i32, i32
  }
  func.func @transform_2(%arg0: i32) -> (i32, i32) {
    %c0_i32 = arith.constant 0 : i32
    %c0_i32_0 = arith.constant 0 : i32
    %c0_i32_1 = arith.constant 0 : i32
    return %c0_i32, %c0_i32_0 : i32, i32
  }
  func.func @transform_3(%arg0: i32) -> (i32, i32) {
    %c0_i32 = arith.constant 0 : i32
    %c0_i32_0 = arith.constant 0 : i32
    %c0_i32_1 = arith.constant 0 : i32
    return %c0_i32, %c0_i32_0 : i32, i32
  }
  func.func @transform_4(%arg0: i32) -> (i32, i32) {
    %c0_i32 = arith.constant 0 : i32
    %c0_i32_0 = arith.constant 0 : i32
    %c0_i32_1 = arith.constant 0 : i32
    return %c0_i32, %c0_i32_0 : i32, i32
  }
  func.func @transform_5(%arg0: i32) -> (i32, i32) {
    %c0_i32 = arith.constant 0 : i32
    %c0_i32_0 = arith.constant 0 : i32
    %c0_i32_1 = arith.constant 0 : i32
    return %c0_i32, %c0_i32_0 : i32, i32
  }
  func.func @transform_6(%arg0: i32) -> (i32, i32) {
    %c0_i32 = arith.constant 0 : i32
    %c0_i32_0 = arith.constant 0 : i32
    return %arg0, %c0_i32 : i32, i32
  }
}

</mosaic_0001>

<llo_original>
// kernel: tpu_custom_call.1
$region0: #{tpu_custom_call.1}
  #allocation0 [shape = 'u32[]', space=smem, size = 0x4, offset = 0x4, fixed_abs, tag = 'smem constant byte address 0x4 - core index']
  #allocation1 [shape = 'u32[144,128]{1,0:T(1,128)}', space=vmem, size = 0x12000, scoped, tag = 'internal scratch']
  %s0 = inlined_call_operand.vmem [shape: f32[1,128], index: 0, kind: input, shape index: {}]
  %s1 = inlined_call_operand.vmem [shape: f32[16,2], index: 1, kind: input, shape index: {}]
  %s2 = inlined_call_operand.vmem [shape: f32[8,128], index: 2, kind: input, shape index: {}]
  %s3 = inlined_call_operand.hbm [shape: f32[128,128], index: 3, kind: input, shape index: {}]
  %s4 = inlined_call_operand.hbm [shape: f32[128,128], index: 4, kind: input, shape index: {}]
  %s5 = inlined_call_operand.vmem [shape: f32[8,128], index: 5, kind: input, shape index: {}]
  %s6 = inlined_call_operand.vmem [shape: f32[16,1], index: 6, kind: output, shape index: {}]
  %s7 = sld [smem:[#allocation0]]
  $region42: #{tpu_custom_call.1} parent=0
    _
  %s9 = ssub.s32 1, %s7
  %s10 = scalar_select 0, %s9, %s7
  $region1: #{tpu_custom_call.1} parent=0
    #allocation2 [shape = 'u8[65536]{0}', space=vmem, size = 0x10000, scoped, tag = 'input window, operand 3, single buffered']
    #allocation3 [shape = 's32[1]{0}', space=sflag, size = 0x4, scoped, tag = 'scoped memory for tpu_custom_call.1']
    #allocation4 [shape = 'u8[65536]{0}', space=vmem, size = 0x10000, scoped, tag = 'input window, operand 4, single buffered']
    #allocation5 [shape = 's32[1]{0}', space=sflag, size = 0x4, scoped, tag = 'scoped memory for tpu_custom_call.1']
    %11 = vsyncpa [#allocation3], 0
    %12 = vsyncpa [#allocation5], 0
    // Predicated region
    $region2: #{tpu_custom_call.1} parent=1 // pred_check
      _
    $region3: #{tpu_custom_call.1} parent=1 // pred_check_branch
      %14 = sbr.rel (0) target = $region5
    $region4: #{tpu_custom_call.1} parent=1 // pred_region
      _
    $region5: #{tpu_custom_call.1} parent=1 // pred_fallthru
      _
    // Predicated region
    $region6: #{tpu_custom_call.1} parent=1 // pred_check
      _
    $region7: #{tpu_custom_call.1} parent=1 // pred_check_branch
      %16 = sbr.rel (0) target = $region9
    $region8: #{tpu_custom_call.1} parent=1 // pred_region
      _
    $region9: #{tpu_custom_call.1} parent=1 // pred_fallthru
      _
    // Predicated region
    $region10: #{tpu_custom_call.1} parent=1 // pred_check
      _
    $region11: #{tpu_custom_call.1} parent=1 // pred_check_branch
      %18 = sbr.rel (0) target = $region13
    $region12: #{tpu_custom_call.1} parent=1 // pred_region
      _
    $region13: #{tpu_custom_call.1} parent=1 // pred_fallthru
      _
    // Predicated region
    $region14: #{tpu_custom_call.1} parent=1 // pred_check
      _
    $region15: #{tpu_custom_call.1} parent=1 // pred_check_branch
      %20 = sbr.rel (0) target = $region17
    $region16: #{tpu_custom_call.1} parent=1 // pred_region
      %s22 = ssub.s32 2048, 2048
      %23 = vsyncadd [#allocation3], %s22
      %s24 = sshll.u32 [#allocation2], 4
      %s25 = int_to_ptr.vmem [resolvable:$true] %s24
      %30 = dma.hbm_to_vmem [thread:$0]  %s3, 2048, %s25, [#allocation3], 128, 128, 8
    $region17: #{tpu_custom_call.1} parent=1 // pred_fallthru
      _
    // Predicated region
    $region18: #{tpu_custom_call.1} parent=1 // pred_check
      _
    $region19: #{tpu_custom_call.1} parent=1 // pred_check_branch
      %32 = sbr.rel (0) target = $region21
    $region20: #{tpu_custom_call.1} parent=1 // pred_region
      %s34 = ssub.s32 2048, 2048
      %35 = vsyncadd [#allocation5], %s34
      %s36 = sshll.u32 [#allocation4], 4
      %s37 = int_to_ptr.vmem [resolvable:$true] %s36
      %42 = dma.hbm_to_vmem [thread:$0]  %s4, 2048, %s37, [#allocation5], 128, 128, 8
    $region21: #{tpu_custom_call.1} parent=1 // pred_fallthru
      _
    // Predicated region
    $region22: #{tpu_custom_call.1} parent=1 // pred_check
      _
    $region23: #{tpu_custom_call.1} parent=1 // pred_check_branch
      %44 = sbr.rel (0) target = $region25
    $region24: #{tpu_custom_call.1} parent=1 // pred_region
      _
    $region25: #{tpu_custom_call.1} parent=1 // pred_fallthru
      _
    // Predicated region
    $region26: #{tpu_custom_call.1} parent=1 // pred_check
      _
    $region27: #{tpu_custom_call.1} parent=1 // pred_check_branch
      %46 = sbr.rel (0) target = $region29
    $region28: #{tpu_custom_call.1} parent=1 // pred_region
      %47 = dma.done [#allocation3], 2048
    $region29: #{tpu_custom_call.1} parent=1 // pred_fallthru
      _
    // Predicated region
    $region30: #{tpu_custom_call.1} parent=1 // pred_check
      _
    $region31: #{tpu_custom_call.1} parent=1 // pred_check_branch
      %49 = sbr.rel (0) target = $region33
    $region32: #{tpu_custom_call.1} parent=1 // pred_region
      %50 = dma.done [#allocation5], 2048
    $region33: #{tpu_custom_call.1} parent=1 // pred_fallthru
      _
    %v51 = vld [vmem:[%s1] sm:$0xff]
    %v52 = vld [vmem:[%s1 + $0x8] sm:$0xff]
    %v53 = vld [vmem:[%s2] sm:$0x1]
    %55 = vset.pattern.permute.xlu0 0
    %56 = vperm.xlu0 %55, %v51
    %v57 = vpop.permute.xlu0 %56
    %60 = vset.pattern.permute.xlu0 0
    %61 = vperm.xlu0 %60, %v52
    %v62 = vpop.permute.xlu0 %61
    %v64 = vlaneseq
    %v65 = vshrl.u32 %v64, 7
    %v66 = vsub.s32 0, %v65
    %v67 = vrot.slane %v53, %v66
    %v68 = vmul.f32 %v57, %v67
    %v69 = vmul.f32 %v62, %v67
    %v70 = vld [vmem:[%s2 + $0x1] sm:$0x1]
    %71 = vset.pattern.permute.xlu0 1
    %72 = vperm.xlu0 %71, %v51
    %v73 = vpop.permute.xlu0 %72
    %75 = vset.pattern.permute.xlu0 1
    %76 = vperm.xlu0 %75, %v52
    %v77 = vpop.permute.xlu0 %76
    %v79 = vlaneseq
    %v80 = vshrl.u32 %v79, 7
    %v81 = vsub.s32 0, %v80
    %v82 = vrot.slane %v70, %v81
    %v83 = vmul.f32 %v73, %v82
    %v84 = vmul.f32 %v77, %v82
    %v85 = vadd.f32 %v68, %v83
    %v86 = vadd.f32 %v69, %v84
    %v87 = vld [vmem:[%s0] sm:$0x1]
    %v89 = vlaneseq
    %v90 = vshrl.u32 %v89, 7
    %v91 = vsub.s32 0, %v90
    %v92 = vrot.slane %v87, %v91
    %v94 = vadd.f32 %v85, %v92
    %v95 = vadd.f32 %v86, %v92
    %v96 = vmax.f32 %v94, 0.0
    %v97 = vmax.f32 %v95, 0.0
    %v98 = vld [vmem:[#allocation2] sm:$0xff]
    %v99 = vld [vmem:[#allocation2 + $0x8] sm:$0xff]
    %v100 = vld [vmem:[#allocation2 + $0x10] sm:$0xff]
    %v101 = vld [vmem:[#allocation2 + $0x18] sm:$0xff]
    %v102 = vld [vmem:[#allocation2 + $0x20] sm:$0xff]
    %v103 = vld [vmem:[#allocation2 + $0x28] sm:$0xff]
    %v104 = vld [vmem:[#allocation2 + $0x30] sm:$0xff]
    %v105 = vld [vmem:[#allocation2 + $0x38] sm:$0xff]
    %v106 = vld [vmem:[#allocation2 + $0x40] sm:$0xff]
    %v107 = vld [vmem:[#allocation2 + $0x48] sm:$0xff]
    %v108 = vld [vmem:[#allocation2 + $0x50] sm:$0xff]
    %v109 = vld [vmem:[#allocation2 + $0x58] sm:$0xff]
    %v110 = vld [vmem:[#allocation2 + $0x60] sm:$0xff]
    %v111 = vld [vmem:[#allocation2 + $0x68] sm:$0xff]
    %v112 = vld [vmem:[#allocation2 + $0x70] sm:$0xff]
    %v113 = vld [vmem:[#allocation2 + $0x78] sm:$0xff]
    %v114 = vld [vmem:[%s5] sm:$0x1]
    %v115 = vlaneseq
    %v116 = vshrl.u32 %v115, 7
    %v117 = vsub.s32 0, %v116
    %v118 = vrot.slane %v114, %v117
    %119 = vmatprep.subr.mxu0 0.0
    %120 = vmatpush1.msra.mxu0 %v98
    %121 = vmatprep.subr.mxu0 0.0
    %122 = vmatpush1.msra.mxu0 %v99
    %123 = vmatprep.subr.mxu0 0.0
    %124 = vmatpush1.msra.mxu0 %v100
    %125 = vmatprep.subr.mxu0 0.0
    %126 = vmatpush1.msra.mxu0 %v101
    %127 = vmatprep.subr.mxu0 0.0
    %128 = vmatpush1.msra.mxu0 %v102
    %129 = vmatprep.subr.mxu0 0.0
    %130 = vmatpush1.msra.mxu0 %v103
    %131 = vmatprep.subr.mxu0 0.0
    %132 = vmatpush1.msra.mxu0 %v104
    %133 = vmatprep.subr.mxu0 0.0
    %134 = vmatpush1.msra.mxu0 %v105
    %135 = vmatprep.subr.mxu0 0.0
    %136 = vmatpush1.msra.mxu0 %v106
    %137 = vmatprep.subr.mxu0 0.0
    %138 = vmatpush1.msra.mxu0 %v107
    %139 = vmatprep.subr.mxu0 0.0
    %140 = vmatpush1.msra.mxu0 %v108
    %141 = vmatprep.subr.mxu0 0.0
    %142 = vmatpush1.msra.mxu0 %v109
    %143 = vmatprep.subr.mxu0 0.0
    %144 = vmatpush1.msra.mxu0 %v110
    %145 = vmatprep.subr.mxu0 0.0
    %146 = vmatpush1.msra.mxu0 %v111
    %147 = vmatprep.subr.mxu0 0.0
    %148 = vmatpush1.msra.mxu0 %v112
    %149 = vmatprep.subr.mxu0 0.0
    %150 = vmatpush1.msra.mxu0 %v113
    %151 = vmatprep.subr.mxu0 0.0
    %152 = vmatpush1.msra.mxu0 0.0
    %153 = vmatprep.subr.mxu0 0.0
    %154 = vmatpush1.msra.mxu0 0.0
    %155 = vmatprep.subr.mxu0 0.0
    %156 = vmatpush1.msra.mxu0 0.0
    %157 = vmatprep.subr.mxu0 0.0
    %158 = vmatpush1.msra.mxu0 0.0
    %159 = vmatprep.subr.mxu0 0.0
    %160 = vmatpush1.msra.mxu0 0.0
    %161 = vmatprep.subr.mxu0 0.0
    %162 = vmatpush1.msra.mxu0 0.0
    %163 = vmatprep.subr.mxu0 0.0
    %164 = vmatpush1.msra.mxu0 0.0
    %165 = vmatprep.subr.mxu0 0.0
    %166 = vmatpush1.msra.mxu0 0.0
    %167 = vmatprep.subr.mxu0 0.0
    %168 = vmatpush1.msra.mxu0 0.0
    %169 = vmatprep.subr.mxu0 0.0
    %170 = vmatpush1.msra.mxu0 0.0
    %171 = vmatprep.subr.mxu0 0.0
    %172 = vmatpush1.msra.mxu0 0.0
    %173 = vmatprep.subr.mxu0 0.0
    %174 = vmatpush1.msra.mxu0 0.0
    %175 = vmatprep.subr.mxu0 0.0
    %176 = vmatpush1.msra.mxu0 0.0
    %177 = vmatprep.subr.mxu0 0.0
    %178 = vmatpush1.msra.mxu0 0.0
    %179 = vmatprep.subr.mxu0 0.0
    %180 = vmatpush1.msra.mxu0 0.0
    %181 = vmatprep.subr.mxu0 0.0
    %182 = vmatpush1.msra.mxu0 0.0
    %183 = vmatprep.mubr.f32.mxu0 0.0
    %184 = vmatmul.mubr.f32.gmra.mrb[0].mxu0 %v96
    %v185 = vpop.f32.mrb[0].mxu0
    %v186 = vadd.f32 %v118, %v185
    %v187 = vpop.f32.mrb[0].mxu0
    %188 = vmatprep.mubr.f32.mxu0 0.0
    %189 = vmatmul.mubr.f32.gmra.mrb[0].mxu0 %v97
    %v190 = vpop.f32.mrb[0].mxu0
    %v191 = vadd.f32 %v118, %v190
    %v192 = vpop.f32.mrb[0].mxu0
    %193 = vdwg.mxu0
    %v194 = vmax.f32 %v186, 0.0
    %v195 = vmax.f32 %v191, 0.0
    %v196 = vld [vmem:[#allocation4] sm:$0xff]
    %v197 = vld [vmem:[#allocation4 + $0x8] sm:$0xff]
    %v198 = vld [vmem:[#allocation4 + $0x10] sm:$0xff]
    %v199 = vld [vmem:[#allocation4 + $0x18] sm:$0xff]
    %v200 = vld [vmem:[#allocation4 + $0x20] sm:$0xff]
    %v201 = vld [vmem:[#allocation4 + $0x28] sm:$0xff]
    %v202 = vld [vmem:[#allocation4 + $0x30] sm:$0xff]
    %v203 = vld [vmem:[#allocation4 + $0x38] sm:$0xff]
    %v204 = vld [vmem:[#allocation4 + $0x40] sm:$0xff]
    %v205 = vld [vmem:[#allocation4 + $0x48] sm:$0xff]
    %v206 = vld [vmem:[#allocation4 + $0x50] sm:$0xff]
    %v207 = vld [vmem:[#allocation4 + $0x58] sm:$0xff]
    %v208 = vld [vmem:[#allocation4 + $0x60] sm:$0xff]
    %v209 = vld [vmem:[#allocation4 + $0x68] sm:$0xff]
    %v210 = vld [vmem:[#allocation4 + $0x70] sm:$0xff]
    %v211 = vld [vmem:[#allocation4 + $0x78] sm:$0xff]
    %v212 = vld [vmem:[%s5 + $0x1] sm:$0x1]
    %v213 = vlaneseq
    %v214 = vshrl.u32 %v213, 7
    %v215 = vsub.s32 0, %v214
    %v216 = vrot.slane %v212, %v215
    %217 = vmatprep.subr.mxu0 0.0
    %218 = vmatpush1.msra.mxu0 %v196
    %219 = vmatprep.subr.mxu0 0.0
    %220 = vmatpush1.msra.mxu0 %v197
    %221 = vmatprep.subr.mxu0 0.0
    %222 = vmatpush1.msra.mxu0 %v198
    %223 = vmatprep.subr.mxu0 0.0
    %224 = vmatpush1.msra.mxu0 %v199
    %225 = vmatprep.subr.mxu0 0.0
    %226 = vmatpush1.msra.mxu0 %v200
    %227 = vmatprep.subr.mxu0 0.0
    %228 = vmatpush1.msra.mxu0 %v201
    %229 = vmatprep.subr.mxu0 0.0
    %230 = vmatpush1.msra.mxu0 %v202
    %231 = vmatprep.subr.mxu0 0.0
    %232 = vmatpush1.msra.mxu0 %v203
    %233 = vmatprep.subr.mxu0 0.0
    %234 = vmatpush1.msra.mxu0 %v204
    %235 = vmatprep.subr.mxu0 0.0
    %236 = vmatpush1.msra.mxu0 %v205
    %237 = vmatprep.subr.mxu0 0.0
    %238 = vmatpush1.msra.mxu0 %v206
    %239 = vmatprep.subr.mxu0 0.0
    %240 = vmatpush1.msra.mxu0 %v207
    %241 = vmatprep.subr.mxu0 0.0
    %242 = vmatpush1.msra.mxu0 %v208
    %243 = vmatprep.subr.mxu0 0.0
    %244 = vmatpush1.msra.mxu0 %v209
    %245 = vmatprep.subr.mxu0 0.0
    %246 = vmatpush1.msra.mxu0 %v210
    %247 = vmatprep.subr.mxu0 0.0
    %248 = vmatpush1.msra.mxu0 %v211
    %249 = vmatprep.subr.mxu0 0.0
    %250 = vmatpush1.msra.mxu0 0.0
    %251 = vmatprep.subr.mxu0 0.0
    %252 = vmatpush1.msra.mxu0 0.0
    %253 = vmatprep.subr.mxu0 0.0
    %254 = vmatpush1.msra.mxu0 0.0
    %255 = vmatprep.subr.mxu0 0.0
    %256 = vmatpush1.msra.mxu0 0.0
    %257 = vmatprep.subr.mxu0 0.0
    %258 = vmatpush1.msra.mxu0 0.0
    %259 = vmatprep.subr.mxu0 0.0
    %260 = vmatpush1.msra.mxu0 0.0
    %261 = vmatprep.subr.mxu0 0.0
    %262 = vmatpush1.msra.mxu0 0.0
    %263 = vmatprep.subr.mxu0 0.0
    %264 = vmatpush1.msra.mxu0 0.0
    %265 = vmatprep.subr.mxu0 0.0
    %266 = vmatpush1.msra.mxu0 0.0
    %267 = vmatprep.subr.mxu0 0.0
    %268 = vmatpush1.msra.mxu0 0.0
    %269 = vmatprep.subr.mxu0 0.0
    %270 = vmatpush1.msra.mxu0 0.0
    %271 = vmatprep.subr.mxu0 0.0
    %272 = vmatpush1.msra.mxu0 0.0
    %273 = vmatprep.subr.mxu0 0.0
    %274 = vmatpush1.msra.mxu0 0.0
    %275 = vmatprep.subr.mxu0 0.0
    %276 = vmatpush1.msra.mxu0 0.0
    %277 = vmatprep.subr.mxu0 0.0
    %278 = vmatpush1.msra.mxu0 0.0
    %279 = vmatprep.subr.mxu0 0.0
    %280 = vmatpush1.msra.mxu0 0.0
    %281 = vmatprep.mubr.f32.mxu0 0.0
    %282 = vmatmul.mubr.f32.gmra.mrb[0].mxu0 %v194
    %v283 = vpop.f32.mrb[0].mxu0
    %v284 = vadd.f32 %v216, %v283
    %v285 = vpop.f32.mrb[0].mxu0
    %286 = vmatprep.mubr.f32.mxu0 0.0
    %287 = vmatmul.mubr.f32.gmra.mrb[0].mxu0 %v195
    %v288 = vpop.f32.mrb[0].mxu0
    %v289 = vadd.f32 %v216, %v288
    %v290 = vpop.f32.mrb[0].mxu0
    %291 = vdwg.mxu0
    %vm292 = vcmask 7168
    %293 = vst.msk [vmem:[%s6] sm:$0xff] %vm292, %v284
    %294 = vst.msk [vmem:[%s6 + $0x8] sm:$0xff] %vm292, %v289
    // Predicated region
    $region34: #{tpu_custom_call.1} parent=1 // pred_check
      _
    $region35: #{tpu_custom_call.1} parent=1 // pred_check_branch
      %296 = sbr.rel (0) target = $region37
    $region36: #{tpu_custom_call.1} parent=1 // pred_region
      _
    $region37: #{tpu_custom_call.1} parent=1 // pred_fallthru
      _
    // Predicated region
    $region38: #{tpu_custom_call.1} parent=1 // pred_check
      _
    $region39: #{tpu_custom_call.1} parent=1 // pred_check_branch
      %298 = sbr.rel (0) target = $region41
    $region40: #{tpu_custom_call.1} parent=1 // pred_region
      _
    $region41: #{tpu_custom_call.1} parent=1 // pred_fallthru
      _
    %299 = vsyncpa [#allocation3], 1
    %300 = vsyncpa [#allocation5], 1

</llo_original>
